<compile_context>
chip_gen: v6e
topology: v6e:2x2x1
jax: 0.10.0
libtpu: 0.0.40
codegen_flags: <defaults>
</compile_context>

<pallas_src>
import math
import numpy as np
import jax
import jax.numpy as jnp
from jax.experimental import pallas as pl
from jax.experimental.pallas import tpu as pltpu

LOG_STD_MAX = 2.0
LOG_STD_MIN = -20.0

FEATURES_DIM = 32      # flatten-extractor output size (in_size)
HIDDEN = 64            # mlp hidden / latent_dim
ACTION_DIM = 3 * 2     # DiagGaussianDistribution(3 * 2)


def _round_up(x, m):
    return ((x + m - 1) // m) * m


# --------------------------------------------------------------------------- kernels
# Transposed layout: features on sublanes, batch on the 128-lane axis.
#   obs_ref : (F, TB) bf16     w*_ref : (out, in) bf16     b*_ref : (out, 1) f32
#   eps_ref : (A, TB) bf16     std_ref: (A, 1) f32
#   act_ref : (A, TB) bf16     mean_ref: (A, TB) f32

def _actor_sample_kernel(obs_ref, eps_ref, std_ref,
                         w1_ref, b1_ref, w2_ref, b2_ref, wa_ref, ba_ref,
                         act_ref, mean_ref):
    x = obs_ref[...]                                                          # (F, TB) bf16
    h1 = jnp.dot(w1_ref[...], x, preferred_element_type=jnp.float32) + b1_ref[...]
    h1 = jnp.maximum(h1, 0.0).astype(jnp.bfloat16)                            # (H, TB)
    h2 = jnp.dot(w2_ref[...], h1, preferred_element_type=jnp.float32) + b2_ref[...]
    h2 = jnp.maximum(h2, 0.0).astype(jnp.bfloat16)                            # (H, TB)
    mean = jnp.dot(wa_ref[...], h2, preferred_element_type=jnp.float32) + ba_ref[...]  # (A, TB) f32
    mean_ref[...] = mean
    act_ref[...] = (mean + std_ref[...] * eps_ref[...].astype(jnp.float32)).astype(act_ref.dtype)


def _actor_mean_kernel(obs_ref,
                       w1_ref, b1_ref, w2_ref, b2_ref, wa_ref, ba_ref,
                       mean_ref):
    # Deterministic path: no eps read, no actions write.
    x = obs_ref[...]
    h1 = jnp.dot(w1_ref[...], x, preferred_element_type=jnp.float32) + b1_ref[...]
    h1 = jnp.maximum(h1, 0.0).astype(jnp.bfloat16)
    h2 = jnp.dot(w2_ref[...], h1, preferred_element_type=jnp.float32) + b2_ref[...]
    h2 = jnp.maximum(h2, 0.0).astype(jnp.bfloat16)
    mean_ref[...] = jnp.dot(wa_ref[...], h2, preferred_element_type=jnp.float32) + ba_ref[...]


# --------------------------------------------------------------------------- wrapper
def _prep_weights(params):
    # Pre-transpose weights to (out, in) and stream as bf16; biases stay f32 (out, 1).
    w1_t = params["w1"].T.astype(jnp.bfloat16)                 # (H, F)
    w2_t = params["w2"].T.astype(jnp.bfloat16)                 # (H, H)
    wa_t = params["wa"].T.astype(jnp.bfloat16)                 # (A, H)
    b1_t = params["b1"].reshape(-1, 1).astype(jnp.float32)     # (H, 1)
    b2_t = params["b2"].reshape(-1, 1).astype(jnp.float32)     # (H, 1)
    ba_t = params["ba"].reshape(-1, 1).astype(jnp.float32)     # (A, 1)
    return w1_t, b1_t, w2_t, b2_t, wa_t, ba_t


def _jnp_forward(obs_flat, params, log_std, eps, deterministic):
    """Fused XLA fallback for small batches (faster than kernel launch + relayouts)."""
    h1 = jnp.maximum(obs_flat @ params["w1"] + params["b1"], 0.0)
    h2 = jnp.maximum(h1 @ params["w2"] + params["b2"], 0.0)
    mean = h2 @ params["wa"] + params["ba"]
    if deterministic:
        return mean, mean
    return mean + jnp.exp(log_std) * eps, mean


def actor_adaptation_forward(observations, params, eps=None, deterministic=False,
                             block_b=4096, min_pallas_batch=1024):
    """observations: (B, ...) float32; returns (actions, (mean, log_std))."""
    B = observations.shape[0]
    obs_flat = observations.reshape(B, -1).astype(jnp.float32)   # flatten extractor
    assert obs_flat.shape[1] == FEATURES_DIM

    # distribution params (scalar-sized work, hoisted out of the kernel)
    log_std = jnp.clip(params["log_std"].reshape(1, ACTION_DIM),
                       LOG_STD_MIN, LOG_STD_MAX).astype(jnp.float32)

    if not deterministic:
        assert eps is not None, "eps (N(0,1) noise) is required for stochastic sampling"

    # ---- small-batch fallback: launch + relayout overhead dwarfs the math here ----
    if B < min_pallas_batch:
        actions, mean = _jnp_forward(obs_flat, params, log_std, eps, deterministic)
        return actions, (mean, log_std)

    # ---- Pallas path: batch tile 128-lane aligned, derived from B, capped at block_b ----
    TB = min(block_b, _round_up(max(B, 1), 128))
    # v7x has 2 TensorCores/chip; keep at least 2 grid steps on the "parallel" batch
    # axis when the batch is big enough so both cores get work (no-op on v5e/v6e).
    if TB >= 256 and _round_up(B, TB) // TB < 2:
        TB = _round_up(TB // 2, 128)
    B_pad = _round_up(B, TB)
    n_tiles = B_pad // TB

    # cast-before-transpose/pad: halves the bytes moved by the host-side relayout ops
    obs_t = jnp.pad(obs_flat.astype(jnp.bfloat16).T, ((0, 0), (0, B_pad - B)))  # (F, B_pad)
    w1_t, b1_t, w2_t, b2_t, wa_t, ba_t = _prep_weights(params)

    const2 = lambda i: (0, 0)
    weight_specs = [
        pl.BlockSpec((HIDDEN, FEATURES_DIM), const2),
        pl.BlockSpec((HIDDEN, 1), const2),
        pl.BlockSpec((HIDDEN, HIDDEN), const2),
        pl.BlockSpec((HIDDEN, 1), const2),
        pl.BlockSpec((ACTION_DIM, HIDDEN), const2),
        pl.BlockSpec((ACTION_DIM, 1), const2),
    ]
    obs_spec = pl.BlockSpec((FEATURES_DIM, TB), lambda i: (0, i))
    out_tile_spec = lambda: pl.BlockSpec((ACTION_DIM, TB), lambda i: (0, i))
    cparams = pltpu.CompilerParams(dimension_semantics=("parallel",))

    if deterministic:
        mean_t = pl.pallas_call(
            _actor_mean_kernel,
            out_shape=jax.ShapeDtypeStruct((ACTION_DIM, B_pad), jnp.float32),
            grid=(n_tiles,),
            in_specs=[obs_spec] + weight_specs,
            out_specs=out_tile_spec(),
            compiler_params=cparams,
        )(obs_t, w1_t, b1_t, w2_t, b2_t, wa_t, ba_t)
        mean = mean_t[:, :B].T          # slice padded tail away before transposing
        actions = mean
    else:
        eps_t = jnp.pad(eps.astype(jnp.bfloat16).T, ((0, 0), (0, B_pad - B)))   # (A, B_pad)
        std_t = jnp.exp(log_std).T                                              # (A, 1) f32
        actions_t, mean_t = pl.pallas_call(
            _actor_sample_kernel,
            out_shape=(jax.ShapeDtypeStruct((ACTION_DIM, B_pad), jnp.bfloat16),   # actions
                       jax.ShapeDtypeStruct((ACTION_DIM, B_pad), jnp.float32)),   # mean
            grid=(n_tiles,),
            in_specs=[obs_spec,
                      pl.BlockSpec((ACTION_DIM, TB), lambda i: (0, i)),
                      pl.BlockSpec((ACTION_DIM, 1), const2)] + weight_specs,
            out_specs=[out_tile_spec(), out_tile_spec()],
            compiler_params=cparams,
        )(obs_t, eps_t, std_t, w1_t, b1_t, w2_t, b2_t, wa_t, ba_t)
        actions = actions_t[:, :B].T.astype(jnp.float32)   # slice-before-transpose
        mean = mean_t[:, :B].T

    return actions, (mean, log_std)


def init_params(key):
    """Deterministic synthetic parameters mirroring layer_init (orthogonal, zero bias)."""
    k1, k2, k3 = jax.random.split(key, 3)
    ortho = jax.nn.initializers.orthogonal(scale=math.sqrt(2.0))
    ortho_small = jax.nn.initializers.orthogonal(scale=0.01)
    return {
        "w1": ortho(k1, (FEATURES_DIM, HIDDEN), jnp.float32),
        "b1": jnp.zeros((1, HIDDEN), jnp.float32),
        "w2": ortho(k2, (HIDDEN, HIDDEN), jnp.float32),
        "b2": jnp.zeros((1, HIDDEN), jnp.float32),
        "wa": ortho_small(k3, (HIDDEN, ACTION_DIM), jnp.float32),
        "ba": jnp.zeros((1, ACTION_DIM), jnp.float32),
        "log_std": jnp.zeros((1, ACTION_DIM), jnp.float32),        # SB3 log_std_init = 0
    }


if __name__ == "__main__":
    key = jax.random.PRNGKey(0)
    k_params, k_obs, k_eps = jax.random.split(key, 3)

    B = 8
    observations = jax.random.normal(k_obs, (B, FEATURES_DIM), jnp.float32)
    eps = jax.random.normal(k_eps, (B, ACTION_DIM), jnp.float32)     # sampling noise
    params = init_params(k_params)

    # Force the Pallas path (min_pallas_batch=0) so the kernel is exercised at this tiny batch.
    actions, (mean, log_std) = actor_adaptation_forward(
        observations, params, eps, deterministic=False, min_pallas_batch=0)
    det_actions, (det_mean, _) = actor_adaptation_forward(
        observations, params, deterministic=True, min_pallas_batch=0)
    # Default dispatch at B=8 takes the fused-XLA small-batch fallback.
    fb_actions, (fb_mean, _) = actor_adaptation_forward(
        observations, params, eps, deterministic=False)
    jax.block_until_ready((actions, mean, log_std, det_actions, det_mean, fb_actions, fb_mean))

    assert actions.shape == (B, ACTION_DIM)
    assert mean.shape == (B, ACTION_DIM)
    assert log_std.shape == (1, ACTION_DIM)

    # pure-JAX fp32 reference (loose tolerance: kernel streams obs/eps/weights as bf16
    # and stores actions as bf16)
    h1 = jnp.maximum(observations @ params["w1"] + params["b1"], 0.0)
    h2 = jnp.maximum(h1 @ params["w2"] + params["b2"], 0.0)
    mean_ref = h2 @ params["wa"] + params["ba"]
    log_std_ref = jnp.clip(params["log_std"], LOG_STD_MIN, LOG_STD_MAX)
    actions_ref = mean_ref + jnp.exp(log_std_ref) * eps

    np.testing.assert_allclose(np.asarray(mean), np.asarray(mean_ref), rtol=5e-2, atol=5e-2)
    np.testing.assert_allclose(np.asarray(actions), np.asarray(actions_ref), rtol=5e-2, atol=5e-2)
    np.testing.assert_allclose(np.asarray(log_std), np.asarray(log_std_ref), rtol=0, atol=0)
    np.testing.assert_allclose(np.asarray(det_actions), np.asarray(det_mean), rtol=0, atol=0)
    np.testing.assert_allclose(np.asarray(det_mean), np.asarray(mean_ref), rtol=5e-2, atol=5e-2)
    # fallback path agrees with the kernel path within bf16 tolerance
    np.testing.assert_allclose(np.asarray(fb_actions), np.asarray(actions), rtol=5e-2, atol=5e-2)
    np.testing.assert_allclose(np.asarray(fb_mean), np.asarray(mean), rtol=5e-2, atol=5e-2)

    print("KERNEL_OK")
</pallas_src>

<mosaic_0001>
module attributes {stable_mosaic.version = 11 : i64} {
  func.func @_actor_sample_kernel(%arg0: i32, %arg1: memref<32x128xbf16, #tpu.memory_space<vmem>>, %arg2: memref<6x128xbf16, #tpu.memory_space<vmem>>, %arg3: memref<6x1xf32, #tpu.memory_space<vmem>>, %arg4: memref<64x32xbf16, #tpu.memory_space<vmem>>, %arg5: memref<64x1xf32, #tpu.memory_space<vmem>>, %arg6: memref<64x64xbf16, #tpu.memory_space<vmem>>, %arg7: memref<64x1xf32, #tpu.memory_space<vmem>>, %arg8: memref<6x64xbf16, #tpu.memory_space<vmem>>, %arg9: memref<6x1xf32, #tpu.memory_space<vmem>>, %arg10: memref<6x128xbf16, #tpu.memory_space<vmem>>, %arg11: memref<6x128xf32, #tpu.memory_space<vmem>>) attributes {dimension_semantics = [#tpu.dimension_semantics<parallel>], iteration_bounds = array<i64: 1>, scalar_prefetch = 0 : i64, scratch_operands = 0 : i64, tpu.core_type = #tpu.core_type<tc>, window_params = [{transform_indices = @transform_0, window_bounds = array<i64: 32, 128>}, {transform_indices = @transform_1, window_bounds = array<i64: 6, 128>}, {pipeline_mode = #tpu.pipeline_mode<synchronous>, transform_indices = @transform_2, window_bounds = array<i64: 6, 1>}, {pipeline_mode = #tpu.pipeline_mode<synchronous>, transform_indices = @transform_3, window_bounds = array<i64: 64, 32>}, {pipeline_mode = #tpu.pipeline_mode<synchronous>, transform_indices = @transform_4, window_bounds = array<i64: 64, 1>}, {pipeline_mode = #tpu.pipeline_mode<synchronous>, transform_indices = @transform_5, window_bounds = array<i64: 64, 64>}, {pipeline_mode = #tpu.pipeline_mode<synchronous>, transform_indices = @transform_6, window_bounds = array<i64: 64, 1>}, {pipeline_mode = #tpu.pipeline_mode<synchronous>, transform_indices = @transform_7, window_bounds = array<i64: 6, 64>}, {pipeline_mode = #tpu.pipeline_mode<synchronous>, transform_indices = @transform_8, window_bounds = array<i64: 6, 1>}, {transform_indices = @transform_9, window_bounds = array<i64: 6, 128>}, {transform_indices = @transform_10, window_bounds = array<i64: 6, 128>}]} {
    %c0 = arith.constant 0 : index
    %c0_0 = arith.constant 0 : index
    %0 = vector.load %arg1[%c0, %c0_0] : memref<32x128xbf16, #tpu.memory_space<vmem>>, vector<32x128xbf16>
    %c0_1 = arith.constant 0 : index
    %c0_2 = arith.constant 0 : index
    %1 = vector.load %arg4[%c0_1, %c0_2] : memref<64x32xbf16, #tpu.memory_space<vmem>>, vector<64x32xbf16>
    %cst = arith.constant dense<0.000000e+00> : vector<64x128xf32>
    %2 = tpu.matmul %1, %0, %cst {dimension_numbers = #tpu.dot_dimension_numbers<[1], [0], [0], [1], [0, 0, 1, 1], [], []>} : vector<64x32xbf16>, vector<32x128xbf16>, vector<64x128xf32> -> vector<64x128xf32>
    %c0_3 = arith.constant 0 : index
    %c0_4 = arith.constant 0 : index
    %3 = vector.load %arg5[%c0_3, %c0_4] : memref<64x1xf32, #tpu.memory_space<vmem>>, vector<64x1xf32>
    %4 = vector.broadcast %3 : vector<64x1xf32> to vector<64x128xf32>
    %5 = arith.addf %2, %4 : vector<64x128xf32>
    %cst_5 = arith.constant 0.000000e+00 : f32
    %6 = vector.broadcast %cst_5 : f32 to vector<64x128xf32>
    %7 = arith.maximumf %5, %6 : vector<64x128xf32>
    %8 = arith.truncf %7 : vector<64x128xf32> to vector<64x128xbf16>
    %c0_6 = arith.constant 0 : index
    %c0_7 = arith.constant 0 : index
    %9 = vector.load %arg6[%c0_6, %c0_7] : memref<64x64xbf16, #tpu.memory_space<vmem>>, vector<64x64xbf16>
    %cst_8 = arith.constant dense<0.000000e+00> : vector<64x128xf32>
    %10 = tpu.matmul %9, %8, %cst_8 {dimension_numbers = #tpu.dot_dimension_numbers<[1], [0], [0], [1], [0, 0, 1, 1], [], []>} : vector<64x64xbf16>, vector<64x128xbf16>, vector<64x128xf32> -> vector<64x128xf32>
    %c0_9 = arith.constant 0 : index
    %c0_10 = arith.constant 0 : index
    %11 = vector.load %arg7[%c0_9, %c0_10] : memref<64x1xf32, #tpu.memory_space<vmem>>, vector<64x1xf32>
    %12 = vector.broadcast %11 : vector<64x1xf32> to vector<64x128xf32>
    %13 = arith.addf %10, %12 : vector<64x128xf32>
    %cst_11 = arith.constant 0.000000e+00 : f32
    %14 = vector.broadcast %cst_11 : f32 to vector<64x128xf32>
    %15 = arith.maximumf %13, %14 : vector<64x128xf32>
    %16 = arith.truncf %15 : vector<64x128xf32> to vector<64x128xbf16>
    %c0_12 = arith.constant 0 : index
    %c0_13 = arith.constant 0 : index
    %17 = vector.load %arg8[%c0_12, %c0_13] : memref<6x64xbf16, #tpu.memory_space<vmem>>, vector<6x64xbf16>
    %cst_14 = arith.constant dense<0.000000e+00> : vector<6x128xf32>
    %18 = tpu.matmul %17, %16, %cst_14 {dimension_numbers = #tpu.dot_dimension_numbers<[1], [0], [0], [1], [0, 0, 1, 1], [], []>} : vector<6x64xbf16>, vector<64x128xbf16>, vector<6x128xf32> -> vector<6x128xf32>
    %c0_15 = arith.constant 0 : index
    %c0_16 = arith.constant 0 : index
    %19 = vector.load %arg9[%c0_15, %c0_16] : memref<6x1xf32, #tpu.memory_space<vmem>>, vector<6x1xf32>
    %20 = vector.broadcast %19 : vector<6x1xf32> to vector<6x128xf32>
    %21 = arith.addf %18, %20 : vector<6x128xf32>
    %c0_17 = arith.constant 0 : index
    %c0_18 = arith.constant 0 : index
    %22 = vector.load %arg11[%c0_17, %c0_18] : memref<6x128xf32, #tpu.memory_space<vmem>>, vector<6x128xf32>
    tpu.vector_store %arg11[%c0_17, %c0_18], %21 {strides = array<i32>} : memref<6x128xf32, #tpu.memory_space<vmem>>, vector<6x128xf32>,
    %c0_19 = arith.constant 0 : index
    %c0_20 = arith.constant 0 : index
    %23 = vector.load %arg3[%c0_19, %c0_20] : memref<6x1xf32, #tpu.memory_space<vmem>>, vector<6x1xf32>
    %c0_21 = arith.constant 0 : index
    %c0_22 = arith.constant 0 : index
    %24 = vector.load %arg2[%c0_21, %c0_22] : memref<6x128xbf16, #tpu.memory_space<vmem>>, vector<6x128xbf16>
    %25 = arith.extf %24 : vector<6x128xbf16> to vector<6x128xf32>
    %26 = vector.broadcast %23 : vector<6x1xf32> to vector<6x128xf32>
    %27 = arith.mulf %26, %25 : vector<6x128xf32>
    %28 = arith.addf %21, %27 : vector<6x128xf32>
    %29 = arith.truncf %28 : vector<6x128xf32> to vector<6x128xbf16>
    %c0_23 = arith.constant 0 : index
    %c0_24 = arith.constant 0 : index
    %30 = vector.load %arg10[%c0_23, %c0_24] : memref<6x128xbf16, #tpu.memory_space<vmem>>, vector<6x128xbf16>
    tpu.vector_store %arg10[%c0_23, %c0_24], %29 {strides = array<i32>} : memref<6x128xbf16, #tpu.memory_space<vmem>>, vector<6x128xbf16>,
    return
  }
  func.func @transform_0(%arg0: i32) -> (i32, i32) {
    %c0_i32 = arith.constant 0 : i32
    %c0_i32_0 = arith.constant 0 : i32
    return %c0_i32, %arg0 : i32, i32
  }
  func.func @transform_1(%arg0: i32) -> (i32, i32) {
    %c0_i32 = arith.constant 0 : i32
    %c0_i32_0 = arith.constant 0 : i32
    return %c0_i32, %arg0 : i32, i32
  }
  func.func @transform_2(%arg0: i32) -> (i32, i32) {
    %c0_i32 = arith.constant 0 : i32
    %c0_i32_0 = arith.constant 0 : i32
    %c0_i32_1 = arith.constant 0 : i32
    return %c0_i32, %c0_i32_0 : i32, i32
  }
  func.func @transform_3(%arg0: i32) -> (i32, i32) {
    %c0_i32 = arith.constant 0 : i32
    %c0_i32_0 = arith.constant 0 : i32
    %c0_i32_1 = arith.constant 0 : i32
    return %c0_i32, %c0_i32_0 : i32, i32
  }
  func.func @transform_4(%arg0: i32) -> (i32, i32) {
    %c0_i32 = arith.constant 0 : i32
    %c0_i32_0 = arith.constant 0 : i32
    %c0_i32_1 = arith.constant 0 : i32
    return %c0_i32, %c0_i32_0 : i32, i32
  }
  func.func @transform_5(%arg0: i32) -> (i32, i32) {
    %c0_i32 = arith.constant 0 : i32
    %c0_i32_0 = arith.constant 0 : i32
    %c0_i32_1 = arith.constant 0 : i32
    return %c0_i32, %c0_i32_0 : i32, i32
  }
  func.func @transform_6(%arg0: i32) -> (i32, i32) {
    %c0_i32 = arith.constant 0 : i32
    %c0_i32_0 = arith.constant 0 : i32
    %c0_i32_1 = arith.constant 0 : i32
    return %c0_i32, %c0_i32_0 : i32, i32
  }
  func.func @transform_7(%arg0: i32) -> (i32, i32) {
    %c0_i32 = arith.constant 0 : i32
    %c0_i32_0 = arith.constant 0 : i32
    %c0_i32_1 = arith.constant 0 : i32
    return %c0_i32, %c0_i32_0 : i32, i32
  }
  func.func @transform_8(%arg0: i32) -> (i32, i32) {
    %c0_i32 = arith.constant 0 : i32
    %c0_i32_0 = arith.constant 0 : i32
    %c0_i32_1 = arith.constant 0 : i32
    return %c0_i32, %c0_i32_0 : i32, i32
  }
  func.func @transform_9(%arg0: i32) -> (i32, i32) {
    %c0_i32 = arith.constant 0 : i32
    %c0_i32_0 = arith.constant 0 : i32
    return %c0_i32, %arg0 : i32, i32
  }
  func.func @transform_10(%arg0: i32) -> (i32, i32) {
    %c0_i32 = arith.constant 0 : i32
    %c0_i32_0 = arith.constant 0 : i32
    return %c0_i32, %arg0 : i32, i32
  }
}

</mosaic_0001>

<llo_original>
// kernel: tpu_custom_call.1
$region0: #{tpu_custom_call.1}
  #allocation0 [shape = 'u32[]', space=smem, size = 0x4, offset = 0x4, fixed_abs, tag = 'smem constant byte address 0x4 - core index']
  #allocation1 [shape = 'u32[144,128]{1,0:T(1,128)}', space=vmem, size = 0x12000, scoped, tag = 'internal scratch']
  %s0 = inlined_call_operand.vmem [shape: bf16[32,128], index: 0, kind: input, shape index: {}]
  %s1 = inlined_call_operand.vmem [shape: bf16[6,128], index: 1, kind: input, shape index: {}]
  %s2 = inlined_call_operand.vmem [shape: f32[6,1], index: 2, kind: input, shape index: {}]
  %s3 = inlined_call_operand.vmem [shape: bf16[64,32], index: 3, kind: input, shape index: {}]
  %s4 = inlined_call_operand.vmem [shape: f32[64,1], index: 4, kind: input, shape index: {}]
  %s5 = inlined_call_operand.vmem [shape: bf16[64,64], index: 5, kind: input, shape index: {}]
  %s6 = inlined_call_operand.vmem [shape: f32[64,1], index: 6, kind: input, shape index: {}]
  %s7 = inlined_call_operand.vmem [shape: bf16[6,64], index: 7, kind: input, shape index: {}]
  %s8 = inlined_call_operand.vmem [shape: f32[6,1], index: 8, kind: input, shape index: {}]
  %s9 = inlined_call_operand.hbm [shape: bf16[6,128], index: 9, kind: output, shape index: {0}]
  %s10 = inlined_call_operand.hbm [shape: f32[6,128], index: 10, kind: output, shape index: {1}]
  %11 = xla_tuple %s9, %s10
  %s12 = sld [smem:[#allocation0]]
  $region54: #{tpu_custom_call.1} parent=0
    _
  %s14 = ssub.s32 1, %s12
  %s15 = scalar_select 0, %s14, %s12
  $region1: #{tpu_custom_call.1} parent=0
    #allocation2 [shape = 'u8[2048]{0}', space=vmem, size = 0x800, scoped, tag = 'output window, operand 0, single buffered']
    #allocation3 [shape = 's32[1]{0}', space=sflag, size = 0x4, scoped, tag = 'scoped memory for tpu_custom_call.1']
    #allocation4 [shape = 'u8[4096]{0}', space=vmem, size = 0x1000, scoped, tag = 'output window, operand 1, single buffered']
    #allocation5 [shape = 's32[1]{0}', space=sflag, size = 0x4, scoped, tag = 'scoped memory for tpu_custom_call.1']
    %16 = vsyncpa [#allocation3], 0
    %17 = vsyncpa [#allocation5], 0
    // Predicated region
    $region2: #{tpu_custom_call.1} parent=1 // pred_check
      _
    $region3: #{tpu_custom_call.1} parent=1 // pred_check_branch
      %19 = sbr.rel (0) target = $region5
    $region4: #{tpu_custom_call.1} parent=1 // pred_region
      _
    $region5: #{tpu_custom_call.1} parent=1 // pred_fallthru
      _
    // Predicated region
    $region6: #{tpu_custom_call.1} parent=1 // pred_check
      _
    $region7: #{tpu_custom_call.1} parent=1 // pred_check_branch
      %21 = sbr.rel (0) target = $region9
    $region8: #{tpu_custom_call.1} parent=1 // pred_region
      _
    $region9: #{tpu_custom_call.1} parent=1 // pred_fallthru
      _
    // Predicated region
    $region10: #{tpu_custom_call.1} parent=1 // pred_check
      _
    $region11: #{tpu_custom_call.1} parent=1 // pred_check_branch
      %23 = sbr.rel (0) target = $region13
    $region12: #{tpu_custom_call.1} parent=1 // pred_region
      _
    $region13: #{tpu_custom_call.1} parent=1 // pred_fallthru
      _
    // Predicated region
    $region14: #{tpu_custom_call.1} parent=1 // pred_check
      _
    $region15: #{tpu_custom_call.1} parent=1 // pred_check_branch
      %25 = sbr.rel (0) target = $region17
    $region16: #{tpu_custom_call.1} parent=1 // pred_region
      _
    $region17: #{tpu_custom_call.1} parent=1 // pred_fallthru
      _
    // Predicated region
    $region18: #{tpu_custom_call.1} parent=1 // pred_check
      _
    $region19: #{tpu_custom_call.1} parent=1 // pred_check_branch
      %27 = sbr.rel (0) target = $region21
    $region20: #{tpu_custom_call.1} parent=1 // pred_region
      _
    $region21: #{tpu_custom_call.1} parent=1 // pred_fallthru
      _
    // Predicated region
    $region22: #{tpu_custom_call.1} parent=1 // pred_check
      _
    $region23: #{tpu_custom_call.1} parent=1 // pred_check_branch
      %29 = sbr.rel (0) target = $region25
    $region24: #{tpu_custom_call.1} parent=1 // pred_region
      _
    $region25: #{tpu_custom_call.1} parent=1 // pred_fallthru
      _
    // Predicated region
    $region26: #{tpu_custom_call.1} parent=1 // pred_check
      _
    $region27: #{tpu_custom_call.1} parent=1 // pred_check_branch
      %31 = sbr.rel (0) target = $region29
    $region28: #{tpu_custom_call.1} parent=1 // pred_region
      _
    $region29: #{tpu_custom_call.1} parent=1 // pred_fallthru
      _
    // Predicated region
    $region30: #{tpu_custom_call.1} parent=1 // pred_check
      _
    $region31: #{tpu_custom_call.1} parent=1 // pred_check_branch
      %33 = sbr.rel (0) target = $region33
    $region32: #{tpu_custom_call.1} parent=1 // pred_region
      _
    $region33: #{tpu_custom_call.1} parent=1 // pred_fallthru
      _
    // Predicated region
    $region34: #{tpu_custom_call.1} parent=1 // pred_check
      _
    $region35: #{tpu_custom_call.1} parent=1 // pred_check_branch
      %35 = sbr.rel (0) target = $region37
    $region36: #{tpu_custom_call.1} parent=1 // pred_region
      _
    $region37: #{tpu_custom_call.1} parent=1 // pred_fallthru
      _
    %v37 = vld [vmem:[%s0] sm:$0xf]
    %v38 = vld [vmem:[%s0 + $0x4] sm:$0xf]
    %v39 = vld [vmem:[%s0 + $0x8] sm:$0xf]
    %v40 = vld [vmem:[%s0 + $0xc] sm:$0xf]
    %v41 = vld [vmem:[%s3] sm:$0xf]
    %v42 = vld [vmem:[%s3 + $0x4] sm:$0xf]
    %v43 = vld [vmem:[%s3 + $0x8] sm:$0xf]
    %v44 = vld [vmem:[%s3 + $0xc] sm:$0xf]
    %v45 = vld [vmem:[%s3 + $0x10] sm:$0xf]
    %v46 = vld [vmem:[%s3 + $0x14] sm:$0xf]
    %v47 = vld [vmem:[%s3 + $0x18] sm:$0xf]
    %v48 = vld [vmem:[%s3 + $0x1c] sm:$0xf]
    %v49 = vld [vmem:[%s4] sm:$0xff]
    %v50 = vld [vmem:[%s4 + $0x8] sm:$0xff]
    %v51 = vld [vmem:[%s4 + $0x10] sm:$0xff]
    %v52 = vld [vmem:[%s4 + $0x18] sm:$0xff]
    %v53 = vld [vmem:[%s4 + $0x20] sm:$0xff]
    %v54 = vld [vmem:[%s4 + $0x28] sm:$0xff]
    %v55 = vld [vmem:[%s4 + $0x30] sm:$0xff]
    %v56 = vld [vmem:[%s4 + $0x38] sm:$0xff]
    %58 = vset.pattern.permute.xlu0 0
    %59 = vperm.xlu0 %58, %v49
    %v60 = vpop.permute.xlu0 %59
    %63 = vset.pattern.permute.xlu0 0
    %64 = vperm.xlu0 %63, %v50
    %v65 = vpop.permute.xlu0 %64
    %68 = vset.pattern.permute.xlu0 0
    %69 = vperm.xlu0 %68, %v51
    %v70 = vpop.permute.xlu0 %69
    %73 = vset.pattern.permute.xlu0 0
    %74 = vperm.xlu0 %73, %v52
    %v75 = vpop.permute.xlu0 %74
    %78 = vset.pattern.permute.xlu0 0
    %79 = vperm.xlu0 %78, %v53
    %v80 = vpop.permute.xlu0 %79
    %83 = vset.pattern.permute.xlu0 0
    %84 = vperm.xlu0 %83, %v54
    %v85 = vpop.permute.xlu0 %84
    %88 = vset.pattern.permute.xlu0 0
    %89 = vperm.xlu0 %88, %v55
    %v90 = vpop.permute.xlu0 %89
    %93 = vset.pattern.permute.xlu0 0
    %94 = vperm.xlu0 %93, %v56
    %v95 = vpop.permute.xlu0 %94
    %v105 = vunpack.c.l.b16 %v41
    %v106 = vunpack.c.l.b16 %v42
    %v107 = vunpack.c.l.b16 %v43
    %v108 = vunpack.c.l.b16 %v44
    %v109 = vunpack.c.l.b16 %v45
    %v110 = vunpack.c.l.b16 %v46
    %v111 = vunpack.c.l.b16 %v47
    %v112 = vunpack.c.l.b16 %v48
    %v113 = vpack.c.b16 %v106, %v105
    %v114 = vpack.c.b16 %v108, %v107
    %v115 = vpack.c.b16 %v110, %v109
    %v116 = vpack.c.b16 %v112, %v111
    %v121 = vunpack.c.l.b16 %v37
    %v122 = vunpack.c.l.b16 %v38
    %v123 = vunpack.c.l.b16 %v39
    %v124 = vunpack.c.l.b16 %v40
    %v125 = vpack.c.b16 %v122, %v121
    %v126 = vpack.c.b16 %v124, %v123
    %vm129 = vcmask 261120
    %v131 = vsel %vm129, %v113, 0
    %v134 = vsel %vm129, %v114, 0
    %v137 = vsel %vm129, %v115, 0
    %v140 = vsel %vm129, %v116, 0
    %142 = vmatprep.subr.bf16.mxu0 0
    %143 = vmatpush1.bf16.msra.mxu0 0
    %144 = vmatprep.subr.bf16.mxu0 0
    %145 = vmatpush1.bf16.msra.mxu0 0
    %146 = vmatprep.subr.bf16.mxu0 0
    %147 = vmatpush1.bf16.msra.mxu0 0
    %148 = vmatprep.subr.bf16.mxu0 0
    %149 = vmatpush1.bf16.msra.mxu0 0
    %150 = vmatprep.subr.bf16.mxu0 0
    %151 = vmatpush1.bf16.msra.mxu0 0
    %152 = vmatprep.subr.bf16.mxu0 0
    %153 = vmatpush1.bf16.msra.mxu0 0
    %154 = vmatprep.subr.bf16.mxu0 0
    %155 = vmatpush1.bf16.msra.mxu0 %v126
    %156 = vmatprep.subr.bf16.mxu0 0
    %157 = vmatpush1.bf16.msra.mxu0 %v125
    %158 = vmatprep.subr.bf16.mxu0 0
    %159 = vmatpush2.bf16.msra.mxu0 0
    %160 = vmatprep.subr.bf16.mxu0 0
    %161 = vmatpush2.bf16.msra.mxu0 0
    %162 = vmatprep.subr.bf16.mxu0 0
    %163 = vmatpush2.bf16.msra.mxu0 0
    %164 = vmatprep.subr.bf16.mxu0 0
    %165 = vmatpush2.bf16.msra.mxu0 0
    %166 = vmatprep.subr.bf16.mxu0 0
    %167 = vmatpush2.bf16.msra.mxu0 0
    %168 = vmatprep.subr.bf16.mxu0 0
    %169 = vmatpush2.bf16.msra.mxu0 0
    %170 = vmatprep.subr.bf16.mxu0 0
    %171 = vmatpush2.bf16.msra.mxu0 0
    %172 = vmatprep.subr.bf16.mxu0 0
    %173 = vmatpush2.bf16.msra.mxu0 0
    %174 = vmatprep.mubr.bf16.mxu0 0
    %175 = vmatmul.mubr.bf16.gmra.mxu0 %v131
    %v176 = vpop.f32.mrf.mxu0
    %v177 = vadd.f32 %v60, %v176
    %v178 = vpop.f32.mrf.mxu0
    %v179 = vpop.f32.mrf.mxu0
    %v180 = vadd.f32 %v65, %v179
    %v181 = vpop.f32.mrf.mxu0
    %182 = vmatprep.mubr.bf16.mxu0 0
    %183 = vmatmul.mubr.bf16.gmra.mxu0 %v134
    %v184 = vpop.f32.mrf.mxu0
    %v185 = vadd.f32 %v70, %v184
    %v186 = vpop.f32.mrf.mxu0
    %v187 = vpop.f32.mrf.mxu0
    %v188 = vadd.f32 %v75, %v187
    %v189 = vpop.f32.mrf.mxu0
    %190 = vmatprep.mubr.bf16.mxu0 0
    %191 = vmatmul.mubr.bf16.gmra.mxu0 %v137
    %v192 = vpop.f32.mrf.mxu0
    %v193 = vadd.f32 %v80, %v192
    %v194 = vpop.f32.mrf.mxu0
    %v195 = vpop.f32.mrf.mxu0
    %v196 = vadd.f32 %v85, %v195
    %v197 = vpop.f32.mrf.mxu0
    %198 = vmatprep.mubr.bf16.mxu0 0
    %199 = vmatmul.mubr.bf16.gmra.mxu0 %v140
    %v200 = vpop.f32.mrf.mxu0
    %v201 = vadd.f32 %v90, %v200
    %v202 = vpop.f32.mrf.mxu0
    %v203 = vpop.f32.mrf.mxu0
    %v204 = vadd.f32 %v95, %v203
    %v205 = vpop.f32.mrf.mxu0
    %206 = vdwg.mxu0
    %v207 = vmax.f32 %v177, 0.0
    %v208 = vmax.f32 %v180, 0.0
    %v209 = vmax.f32 %v185, 0.0
    %v210 = vmax.f32 %v188, 0.0
    %v211 = vmax.f32 %v193, 0.0
    %v212 = vmax.f32 %v196, 0.0
    %v213 = vmax.f32 %v201, 0.0
    %v214 = vmax.f32 %v204, 0.0
    %v215 = vpack.c.bf16 %v208, %v207
    %v216 = vpack.c.bf16 %v210, %v209
    %v217 = vpack.c.bf16 %v212, %v211
    %v218 = vpack.c.bf16 %v214, %v213
    %v219 = vld [vmem:[%s5] sm:$0xf]
    %v220 = vld [vmem:[%s5 + $0x4] sm:$0xf]
    %v221 = vld [vmem:[%s5 + $0x8] sm:$0xf]
    %v222 = vld [vmem:[%s5 + $0xc] sm:$0xf]
    %v223 = vld [vmem:[%s5 + $0x10] sm:$0xf]
    %v224 = vld [vmem:[%s5 + $0x14] sm:$0xf]
    %v225 = vld [vmem:[%s5 + $0x18] sm:$0xf]
    %v226 = vld [vmem:[%s5 + $0x1c] sm:$0xf]
    %v227 = vld [vmem:[%s6] sm:$0xff]
    %v228 = vld [vmem:[%s6 + $0x8] sm:$0xff]
    %v229 = vld [vmem:[%s6 + $0x10] sm:$0xff]
    %v230 = vld [vmem:[%s6 + $0x18] sm:$0xff]
    %v231 = vld [vmem:[%s6 + $0x20] sm:$0xff]
    %v232 = vld [vmem:[%s6 + $0x28] sm:$0xff]
    %v233 = vld [vmem:[%s6 + $0x30] sm:$0xff]
    %v234 = vld [vmem:[%s6 + $0x38] sm:$0xff]
    %236 = vset.pattern.permute.xlu0 0
    %237 = vperm.xlu0 %236, %v227
    %v238 = vpop.permute.xlu0 %237
    %241 = vset.pattern.permute.xlu0 0
    %242 = vperm.xlu0 %241, %v228
    %v243 = vpop.permute.xlu0 %242
    %246 = vset.pattern.permute.xlu0 0
    %247 = vperm.xlu0 %246, %v229
    %v248 = vpop.permute.xlu0 %247
    %251 = vset.pattern.permute.xlu0 0
    %252 = vperm.xlu0 %251, %v230
    %v253 = vpop.permute.xlu0 %252
    %256 = vset.pattern.permute.xlu0 0
    %257 = vperm.xlu0 %256, %v231
    %v258 = vpop.permute.xlu0 %257
    %261 = vset.pattern.permute.xlu0 0
    %262 = vperm.xlu0 %261, %v232
    %v263 = vpop.permute.xlu0 %262
    %266 = vset.pattern.permute.xlu0 0
    %267 = vperm.xlu0 %266, %v233
    %v268 = vpop.permute.xlu0 %267
    %271 = vset.pattern.permute.xlu0 0
    %272 = vperm.xlu0 %271, %v234
    %v273 = vpop.permute.xlu0 %272
    %v283 = vunpack.c.l.b16 %v219
    %v284 = vunpack.c.l.b16 %v220
    %v285 = vunpack.c.l.b16 %v221
    %v286 = vunpack.c.l.b16 %v222
    %v287 = vunpack.c.l.b16 %v223
    %v288 = vunpack.c.l.b16 %v224
    %v289 = vunpack.c.l.b16 %v225
    %v290 = vunpack.c.l.b16 %v226
    %v291 = vpack.c.b16 %v284, %v283
    %v292 = vpack.c.b16 %v286, %v285
    %v293 = vpack.c.b16 %v288, %v287
    %v294 = vpack.c.b16 %v290, %v289
    %vm295 = vcmask 523264
    %v297 = vsel %vm295, %v291, 0
    %v300 = vsel %vm295, %v292, 0
    %v303 = vsel %vm295, %v293, 0
    %v306 = vsel %vm295, %v294, 0
    %308 = vmatprep.subr.bf16.mxu0 0
    %309 = vmatpush1.bf16.msra.mxu0 0
    %310 = vmatprep.subr.bf16.mxu0 0
    %311 = vmatpush1.bf16.msra.mxu0 0
    %312 = vmatprep.subr.bf16.mxu0 0
    %313 = vmatpush1.bf16.msra.mxu0 0
    %314 = vmatprep.subr.bf16.mxu0 0
    %315 = vmatpush1.bf16.msra.mxu0 0
    %316 = vmatprep.subr.bf16.mxu0 0
    %317 = vmatpush1.bf16.msra.mxu0 %v218
    %318 = vmatprep.subr.bf16.mxu0 0
    %319 = vmatpush1.bf16.msra.mxu0 %v217
    %320 = vmatprep.subr.bf16.mxu0 0
    %321 = vmatpush1.bf16.msra.mxu0 %v216
    %322 = vmatprep.subr.bf16.mxu0 0
    %323 = vmatpush1.bf16.msra.mxu0 %v215
    %324 = vmatprep.subr.bf16.mxu0 0
    %325 = vmatpush2.bf16.msra.mxu0 0
    %326 = vmatprep.subr.bf16.mxu0 0
    %327 = vmatpush2.bf16.msra.mxu0 0
    %328 = vmatprep.subr.bf16.mxu0 0
    %329 = vmatpush2.bf16.msra.mxu0 0
    %330 = vmatprep.subr.bf16.mxu0 0
    %331 = vmatpush2.bf16.msra.mxu0 0
    %332 = vmatprep.subr.bf16.mxu0 0
    %333 = vmatpush2.bf16.msra.mxu0 0
    %334 = vmatprep.subr.bf16.mxu0 0
    %335 = vmatpush2.bf16.msra.mxu0 0
    %336 = vmatprep.subr.bf16.mxu0 0
    %337 = vmatpush2.bf16.msra.mxu0 0
    %338 = vmatprep.subr.bf16.mxu0 0
    %339 = vmatpush2.bf16.msra.mxu0 0
    %340 = vmatprep.mubr.bf16.mxu0 0
    %341 = vmatmul.mubr.bf16.gmra.mxu0 %v297
    %v342 = vpop.f32.mrf.mxu0
    %v343 = vadd.f32 %v238, %v342
    %v344 = vpop.f32.mrf.mxu0
    %v345 = vpop.f32.mrf.mxu0
    %v346 = vadd.f32 %v243, %v345
    %v347 = vpop.f32.mrf.mxu0
    %348 = vmatprep.mubr.bf16.mxu0 0
    %349 = vmatmul.mubr.bf16.gmra.mxu0 %v300
    %v350 = vpop.f32.mrf.mxu0
    %v351 = vadd.f32 %v248, %v350
    %v352 = vpop.f32.mrf.mxu0
    %v353 = vpop.f32.mrf.mxu0
    %v354 = vadd.f32 %v253, %v353
    %v355 = vpop.f32.mrf.mxu0
    %356 = vmatprep.mubr.bf16.mxu0 0
    %357 = vmatmul.mubr.bf16.gmra.mxu0 %v303
    %v358 = vpop.f32.mrf.mxu0
    %v359 = vadd.f32 %v258, %v358
    %v360 = vpop.f32.mrf.mxu0
    %v361 = vpop.f32.mrf.mxu0
    %v362 = vadd.f32 %v263, %v361
    %v363 = vpop.f32.mrf.mxu0
    %364 = vmatprep.mubr.bf16.mxu0 0
    %365 = vmatmul.mubr.bf16.gmra.mxu0 %v306
    %v366 = vpop.f32.mrf.mxu0
    %v367 = vadd.f32 %v268, %v366
    %v368 = vpop.f32.mrf.mxu0
    %v369 = vpop.f32.mrf.mxu0
    %v370 = vadd.f32 %v273, %v369
    %v371 = vpop.f32.mrf.mxu0
    %372 = vdwg.mxu0
    %v373 = vmax.f32 %v343, 0.0
    %v374 = vmax.f32 %v346, 0.0
    %v375 = vmax.f32 %v351, 0.0
    %v376 = vmax.f32 %v354, 0.0
    %v377 = vmax.f32 %v359, 0.0
    %v378 = vmax.f32 %v362, 0.0
    %v379 = vmax.f32 %v367, 0.0
    %v380 = vmax.f32 %v370, 0.0
    %v381 = vpack.c.bf16 %v374, %v373
    %v382 = vpack.c.bf16 %v376, %v375
    %v383 = vpack.c.bf16 %v378, %v377
    %v384 = vpack.c.bf16 %v380, %v379
    %v385 = vld [vmem:[%s7] sm:$0x7]
    %v386 = vld [vmem:[%s8] sm:$0x3f]
    %388 = vset.pattern.permute.xlu0 0
    %389 = vperm.xlu0 %388, %v386
    %v390 = vpop.permute.xlu0 %389
    %v393 = vsel %vm295, %v385, 0
    %395 = vmatprep.subr.bf16.mxu0 0
    %396 = vmatpush1.bf16.msra.mxu0 0
    %397 = vmatprep.subr.bf16.mxu0 0
    %398 = vmatpush1.bf16.msra.mxu0 0
    %399 = vmatprep.subr.bf16.mxu0 0
    %400 = vmatpush1.bf16.msra.mxu0 0
    %401 = vmatprep.subr.bf16.mxu0 0
    %402 = vmatpush1.bf16.msra.mxu0 0
    %403 = vmatprep.subr.bf16.mxu0 0
    %404 = vmatpush1.bf16.msra.mxu0 %v384
    %405 = vmatprep.subr.bf16.mxu0 0
    %406 = vmatpush1.bf16.msra.mxu0 %v383
    %407 = vmatprep.subr.bf16.mxu0 0
    %408 = vmatpush1.bf16.msra.mxu0 %v382
    %409 = vmatprep.subr.bf16.mxu0 0
    %410 = vmatpush1.bf16.msra.mxu0 %v381
    %411 = vmatprep.subr.bf16.mxu0 0
    %412 = vmatpush2.bf16.msra.mxu0 0
    %413 = vmatprep.subr.bf16.mxu0 0
    %414 = vmatpush2.bf16.msra.mxu0 0
    %415 = vmatprep.subr.bf16.mxu0 0
    %416 = vmatpush2.bf16.msra.mxu0 0
    %417 = vmatprep.subr.bf16.mxu0 0
    %418 = vmatpush2.bf16.msra.mxu0 0
    %419 = vmatprep.subr.bf16.mxu0 0
    %420 = vmatpush2.bf16.msra.mxu0 0
    %421 = vmatprep.subr.bf16.mxu0 0
    %422 = vmatpush2.bf16.msra.mxu0 0
    %423 = vmatprep.subr.bf16.mxu0 0
    %424 = vmatpush2.bf16.msra.mxu0 0
    %425 = vmatprep.subr.bf16.mxu0 0
    %426 = vmatpush2.bf16.msra.mxu0 0
    %427 = vmatprep.mubr.bf16.mxu0 0
    %428 = vmatmul.mubr.bf16.gmra.mxu0 %v393
    %v429 = vpop.f32.mrf.mxu0
    %v430 = vadd.f32 %v390, %v429
    %v431 = vpop.f32.mrf.mxu0
    %v432 = vpop.f32.mrf.mxu0
    %v433 = vpop.f32.mrf.mxu0
    %434 = vdwg.mxu0
    %435 = vst [vmem:[#allocation4] sm:$0x3f] %v430
    %v436 = vld [vmem:[%s2] sm:$0x3f]
    %v437 = vld [vmem:[%s1] sm:$0x7]
    %v438 = vunpack.c.l.bf16 %v437
    %440 = vset.pattern.permute.xlu0 0
    %441 = vperm.xlu0 %440, %v436
    %v442 = vpop.permute.xlu0 %441
    %v444 = vmul.f32 %v442, %v438
    %v445 = vadd.f32 %v430, %v444
    %v446 = vpack.c.bf16 %v445, %v445
    %447 = vst [vmem:[#allocation2] sm:$0x7] %v446
    // Predicated region
    $region38: #{tpu_custom_call.1} parent=1 // pred_check
      _
    $region39: #{tpu_custom_call.1} parent=1 // pred_check_branch
      %449 = sbr.rel (0) target = $region41
    $region40: #{tpu_custom_call.1} parent=1 // pred_region
      %s451 = ssub.s32 64, 64
      %452 = vsyncadd [#allocation3], %s451
      %s454 = sshll.u32 [#allocation2], 4
      %s455 = int_to_ptr.vmem [resolvable:$true] %s454
      %457 = dma.vmem_to_hbm [thread:$0]  %s455, 64, %s9, [#allocation3]
    $region41: #{tpu_custom_call.1} parent=1 // pred_fallthru
      _
    // Predicated region
    $region42: #{tpu_custom_call.1} parent=1 // pred_check
      _
    $region43: #{tpu_custom_call.1} parent=1 // pred_check_branch
      %459 = sbr.rel (0) target = $region45
    $region44: #{tpu_custom_call.1} parent=1 // pred_region
      %s461 = ssub.s32 128, 128
      %462 = vsyncadd [#allocation5], %s461
      %s464 = sshll.u32 [#allocation4], 4
      %s465 = int_to_ptr.vmem [resolvable:$true] %s464
      %467 = dma.vmem_to_hbm [thread:$0]  %s465, 128, %s10, [#allocation5]
    $region45: #{tpu_custom_call.1} parent=1 // pred_fallthru
      _
    // Predicated region
    $region46: #{tpu_custom_call.1} parent=1 // pred_check
      _
    $region47: #{tpu_custom_call.1} parent=1 // pred_check_branch
      %469 = sbr.rel (0) target = $region49
    $region48: #{tpu_custom_call.1} parent=1 // pred_region
      %470 = dma.done [#allocation3], 64
    $region49: #{tpu_custom_call.1} parent=1 // pred_fallthru
      _
    // Predicated region
    $region50: #{tpu_custom_call.1} parent=1 // pred_check
      _
    $region51: #{tpu_custom_call.1} parent=1 // pred_check_branch
      %472 = sbr.rel (0) target = $region53
    $region52: #{tpu_custom_call.1} parent=1 // pred_region
      %473 = dma.done [#allocation5], 128
    $region53: #{tpu_custom_call.1} parent=1 // pred_fallthru
      _
    %474 = vsyncpa [#allocation3], 1
    %475 = vsyncpa [#allocation5], 1

</llo_original>
